<compile_context>
chip_gen: v7x
topology: tpu7x:2x2x1
jax: 0.10.0
libtpu: 0.0.40
codegen_flags: <defaults>
</compile_context>

<pallas_src>
import functools

import jax
import jax.numpy as jnp
from jax import lax
from jax.experimental import pallas as pl
from jax.experimental.pallas import tpu as pltpu


# ---------------------------------------------------------------------------
# Path A: whole table resident in VMEM, single grid step.
# ---------------------------------------------------------------------------
def _resident_gather_kernel(qids_ref, table_ref, out_ref, *, batch_rows):
    # qids_ref : (B_padded,) int32 in SMEM (scalar prefetch)
    # table_ref: (N, D)      VMEM  -- whole embedding table
    # out_ref  : (B_padded, D) VMEM -- whole output slab (sublane+lane dense)
    def body(r, carry):
        qid = qids_ref[r]
        out_ref[pl.ds(r, 1), :] = table_ref[pl.ds(qid, 1), :]
        return carry

    lax.fori_loop(0, batch_rows, body, 0, unroll=True)


def _gather_vmem_resident(qids_padded, table, vmem_limit_bytes):
    bp = qids_padded.shape[0]
    n, d = table.shape
    kernel = functools.partial(_resident_gather_kernel, batch_rows=bp)
    grid_spec = pltpu.PrefetchScalarGridSpec(
        num_scalar_prefetch=1,
        grid=(1,),  # single invocation: the whole gather happens in-kernel
        in_specs=[pl.BlockSpec((n, d), lambda i, qids: (0, 0))],
        out_specs=pl.BlockSpec((bp, d), lambda i, qids: (0, 0)),
    )
    return pl.pallas_call(
        kernel,
        out_shape=jax.ShapeDtypeStruct((bp, d), table.dtype),
        grid_spec=grid_spec,
        compiler_params=pltpu.CompilerParams(
            dimension_semantics=("arbitrary",),
            vmem_limit_bytes=int(vmem_limit_bytes),
        ),
    )(qids_padded, table)


# ---------------------------------------------------------------------------
# Path B: table stays in HBM; manual grouped row DMAs (latency overlapped).
# ---------------------------------------------------------------------------
def _dma_gather_kernel(qids_ref, table_hbm, out_ref, rows_vmem, sems, *,
                       rows_per_step):
    # qids_ref : (B_padded,) int32 in SMEM (scalar prefetch)
    # table_hbm: (N, D) ref left in HBM (memory_space=pl.ANY)
    # out_ref  : (rows_per_step, D) VMEM output tile for this grid step
    # rows_vmem: (rows_per_step, D) VMEM scratch
    # sems     : (rows_per_step,)   DMA semaphores
    step = pl.program_id(0)
    base = step * rows_per_step

    # Issue every row DMA of this step before waiting on any of them so their
    # latencies overlap (the gather is latency-bound, not bandwidth-bound).
    for r in range(rows_per_step):
        qid = qids_ref[base + r]
        pltpu.make_async_copy(
            table_hbm.at[pl.ds(qid, 1), :],
            rows_vmem.at[pl.ds(r, 1), :],
            sems.at[r],
        ).start()

    for r in range(rows_per_step):
        pltpu.make_async_copy(
            table_hbm.at[pl.ds(0, 1), :],   # same-shape descriptor for wait
            rows_vmem.at[pl.ds(r, 1), :],
            sems.at[r],
        ).wait()

    out_ref[...] = rows_vmem[...]


def _gather_manual_dma(qids_padded, table, rows_per_step):
    bp = qids_padded.shape[0]
    n, d = table.shape
    kernel = functools.partial(_dma_gather_kernel, rows_per_step=rows_per_step)
    grid_spec = pltpu.PrefetchScalarGridSpec(
        num_scalar_prefetch=1,
        grid=(bp // rows_per_step,),
        in_specs=[pl.BlockSpec(memory_space=pl.ANY)],  # table stays in HBM
        out_specs=pl.BlockSpec((rows_per_step, d), lambda i, qids: (i, 0)),
        scratch_shapes=[
            pltpu.VMEM((rows_per_step, d), table.dtype),
            pltpu.SemaphoreType.DMA((rows_per_step,)),
        ],
    )
    return pl.pallas_call(
        kernel,
        out_shape=jax.ShapeDtypeStruct((bp, d), table.dtype),
        grid_spec=grid_spec,
        compiler_params=pltpu.CompilerParams(
            # independent output tiles -> shard across TCs on v7x
            dimension_semantics=("parallel",),
        ),
    )(qids_padded, table)


# ---------------------------------------------------------------------------
# Wrapper: PreExtractedEmbedding.forward equivalent.
# ---------------------------------------------------------------------------
def pre_extracted_embedding(qids, table, *, rows_per_step=8,
                            vmem_budget_bytes=48 * 1024 * 1024):
    """stack(table[qid] for qid in qids)  ==  jnp.take(table, qids, axis=0)."""
    assert rows_per_step % 8 == 0, "rows_per_step must be a multiple of 8"
    b = qids.shape[0]
    n, d = table.shape
    itemsize = jnp.dtype(table.dtype).itemsize

    # Clamp ids so a bad qid can never become an out-of-bounds DMA.
    qids_i32 = jnp.clip(qids.astype(jnp.int32), 0, n - 1)

    # Pad the batch so every output tile is sublane dense (multiple of 8 rows)
    # and divisible by the DMA-path row tile.
    pad_to = max(8, rows_per_step)
    bp = ((b + pad_to - 1) // pad_to) * pad_to
    if bp != b:
        qids_i32 = jnp.concatenate(
            [qids_i32, jnp.zeros((bp - b,), dtype=jnp.int32)])

    # VMEM-residency decision: 2x for the pipeliner's double buffering plus
    # slack.  Default 48 MiB budget is safe on every generation (v7x has only
    # 64 MiB physical VMEM vs 128 MiB on v5e/v6e).
    need = 2 * (n * d + bp * d) * itemsize + (2 << 20)
    if need <= vmem_budget_bytes:
        vmem_limit = int(min(vmem_budget_bytes, max(need, 32 * 1024 * 1024)))
        out = _gather_vmem_resident(qids_i32, table, vmem_limit)
    else:
        out = _gather_manual_dma(qids_i32, table, rows_per_step)

    return out[:b] if bp != b else out


if __name__ == "__main__":
    key = jax.random.PRNGKey(0)
    k_tab, k_ids, k_ids2 = jax.random.split(key, 3)

    num_qids = 64          # number of distinct "pre-extracted" embeddings
    out_dim = 128          # text_out_dim
    batch = 8              # len(qids)

    # TODO(synk): original module loads per-qid .npy files with an lru_cache;
    # replaced by a deterministic synthetic in-memory embedding table.
    table = jax.random.normal(k_tab, (num_qids, out_dim), dtype=jnp.float32)
    qids = jax.random.randint(k_ids, (batch,), 0, num_qids, dtype=jnp.int32)
    ref = jnp.take(table, qids, axis=0)

    # Path A: VMEM-resident table, single kernel invocation.
    out_a = jax.block_until_ready(pre_extracted_embedding(qids, table))
    assert out_a.shape == (batch, out_dim) and out_a.dtype == jnp.float32
    assert bool(jnp.array_equal(out_a, ref)), "resident path mismatch"

    # Path B: force the manual-DMA gather path (used for large tables).
    out_b = jax.block_until_ready(
        pre_extracted_embedding(qids, table, vmem_budget_bytes=0))
    assert bool(jnp.array_equal(out_b, ref)), "manual-DMA path mismatch"

    # Batch not a multiple of 8 -> exercises padding + slice-back on both paths.
    qids_odd = jax.random.randint(k_ids2, (5,), 0, num_qids, dtype=jnp.int32)
    ref_odd = jnp.take(table, qids_odd, axis=0)
    out_c = jax.block_until_ready(pre_extracted_embedding(qids_odd, table))
    assert out_c.shape == (5, out_dim)
    assert bool(jnp.array_equal(out_c, ref_odd)), "padded resident mismatch"
    out_d = jax.block_until_ready(
        pre_extracted_embedding(qids_odd, table, vmem_budget_bytes=0))
    assert bool(jnp.array_equal(out_d, ref_odd)), "padded DMA mismatch"

    print("KERNEL_OK")
</pallas_src>

<mosaic_0001>
module attributes {stable_mosaic.version = 11 : i64} {
  func.func @_resident_gather_kernel(%arg0: i32, %arg1: memref<8xi32, #tpu.memory_space<smem>>, %arg2: memref<64x128xf32, #tpu.memory_space<vmem>>, %arg3: memref<8x128xf32, #tpu.memory_space<vmem>>) attributes {dimension_semantics = [#tpu.dimension_semantics<arbitrary>], iteration_bounds = array<i64: 1>, scalar_prefetch = 1 : i64, scratch_operands = 0 : i64, tpu.core_type = #tpu.core_type<tc>, window_params = [{pipeline_mode = #tpu.pipeline_mode<synchronous>, transform_indices = @transform_0, window_bounds = array<i64: 64, 128>}, {pipeline_mode = #tpu.pipeline_mode<synchronous>, transform_indices = @transform_1, window_bounds = array<i64: 8, 128>}]} {
    %c0_i32 = arith.constant 0 : i32
    %0 = arith.index_cast %c0_i32 : i32 to index
    %1 = memref.load %arg1[%0] : memref<8xi32, #tpu.memory_space<smem>>
    %2 = arith.index_cast %1 : i32 to index
    %c0 = arith.constant 0 : index
    %3 = vector.load %arg2[%2, %c0] : memref<64x128xf32, #tpu.memory_space<vmem>>, vector<1x128xf32>
    %4 = arith.index_cast %c0_i32 : i32 to index
    %c0_0 = arith.constant 0 : index
    %5 = vector.load %arg3[%4, %c0_0] : memref<8x128xf32, #tpu.memory_space<vmem>>, vector<1x128xf32>
    tpu.vector_store %arg3[%4, %c0_0], %3 {strides = array<i32>} : memref<8x128xf32, #tpu.memory_space<vmem>>, vector<1x128xf32>,
    %c1_i32 = arith.constant 1 : i32
    %6 = arith.index_cast %c1_i32 : i32 to index
    %7 = memref.load %arg1[%6] : memref<8xi32, #tpu.memory_space<smem>>
    %8 = arith.index_cast %7 : i32 to index
    %c0_1 = arith.constant 0 : index
    %9 = vector.load %arg2[%8, %c0_1] : memref<64x128xf32, #tpu.memory_space<vmem>>, vector<1x128xf32>
    %10 = arith.index_cast %c1_i32 : i32 to index
    %c0_2 = arith.constant 0 : index
    %11 = vector.load %arg3[%10, %c0_2] : memref<8x128xf32, #tpu.memory_space<vmem>>, vector<1x128xf32>
    tpu.vector_store %arg3[%10, %c0_2], %9 {strides = array<i32>} : memref<8x128xf32, #tpu.memory_space<vmem>>, vector<1x128xf32>,
    %c2_i32 = arith.constant 2 : i32
    %12 = arith.index_cast %c2_i32 : i32 to index
    %13 = memref.load %arg1[%12] : memref<8xi32, #tpu.memory_space<smem>>
    %14 = arith.index_cast %13 : i32 to index
    %c0_3 = arith.constant 0 : index
    %15 = vector.load %arg2[%14, %c0_3] : memref<64x128xf32, #tpu.memory_space<vmem>>, vector<1x128xf32>
    %16 = arith.index_cast %c2_i32 : i32 to index
    %c0_4 = arith.constant 0 : index
    %17 = vector.load %arg3[%16, %c0_4] : memref<8x128xf32, #tpu.memory_space<vmem>>, vector<1x128xf32>
    tpu.vector_store %arg3[%16, %c0_4], %15 {strides = array<i32>} : memref<8x128xf32, #tpu.memory_space<vmem>>, vector<1x128xf32>,
    %c3_i32 = arith.constant 3 : i32
    %18 = arith.index_cast %c3_i32 : i32 to index
    %19 = memref.load %arg1[%18] : memref<8xi32, #tpu.memory_space<smem>>
    %20 = arith.index_cast %19 : i32 to index
    %c0_5 = arith.constant 0 : index
    %21 = vector.load %arg2[%20, %c0_5] : memref<64x128xf32, #tpu.memory_space<vmem>>, vector<1x128xf32>
    %22 = arith.index_cast %c3_i32 : i32 to index
    %c0_6 = arith.constant 0 : index
    %23 = vector.load %arg3[%22, %c0_6] : memref<8x128xf32, #tpu.memory_space<vmem>>, vector<1x128xf32>
    tpu.vector_store %arg3[%22, %c0_6], %21 {strides = array<i32>} : memref<8x128xf32, #tpu.memory_space<vmem>>, vector<1x128xf32>,
    %c4_i32 = arith.constant 4 : i32
    %24 = arith.index_cast %c4_i32 : i32 to index
    %25 = memref.load %arg1[%24] : memref<8xi32, #tpu.memory_space<smem>>
    %26 = arith.index_cast %25 : i32 to index
    %c0_7 = arith.constant 0 : index
    %27 = vector.load %arg2[%26, %c0_7] : memref<64x128xf32, #tpu.memory_space<vmem>>, vector<1x128xf32>
    %28 = arith.index_cast %c4_i32 : i32 to index
    %c0_8 = arith.constant 0 : index
    %29 = vector.load %arg3[%28, %c0_8] : memref<8x128xf32, #tpu.memory_space<vmem>>, vector<1x128xf32>
    tpu.vector_store %arg3[%28, %c0_8], %27 {strides = array<i32>} : memref<8x128xf32, #tpu.memory_space<vmem>>, vector<1x128xf32>,
    %c5_i32 = arith.constant 5 : i32
    %30 = arith.index_cast %c5_i32 : i32 to index
    %31 = memref.load %arg1[%30] : memref<8xi32, #tpu.memory_space<smem>>
    %32 = arith.index_cast %31 : i32 to index
    %c0_9 = arith.constant 0 : index
    %33 = vector.load %arg2[%32, %c0_9] : memref<64x128xf32, #tpu.memory_space<vmem>>, vector<1x128xf32>
    %34 = arith.index_cast %c5_i32 : i32 to index
    %c0_10 = arith.constant 0 : index
    %35 = vector.load %arg3[%34, %c0_10] : memref<8x128xf32, #tpu.memory_space<vmem>>, vector<1x128xf32>
    tpu.vector_store %arg3[%34, %c0_10], %33 {strides = array<i32>} : memref<8x128xf32, #tpu.memory_space<vmem>>, vector<1x128xf32>,
    %c6_i32 = arith.constant 6 : i32
    %36 = arith.index_cast %c6_i32 : i32 to index
    %37 = memref.load %arg1[%36] : memref<8xi32, #tpu.memory_space<smem>>
    %38 = arith.index_cast %37 : i32 to index
    %c0_11 = arith.constant 0 : index
    %39 = vector.load %arg2[%38, %c0_11] : memref<64x128xf32, #tpu.memory_space<vmem>>, vector<1x128xf32>
    %40 = arith.index_cast %c6_i32 : i32 to index
    %c0_12 = arith.constant 0 : index
    %41 = vector.load %arg3[%40, %c0_12] : memref<8x128xf32, #tpu.memory_space<vmem>>, vector<1x128xf32>
    tpu.vector_store %arg3[%40, %c0_12], %39 {strides = array<i32>} : memref<8x128xf32, #tpu.memory_space<vmem>>, vector<1x128xf32>,
    %c7_i32 = arith.constant 7 : i32
    %42 = arith.index_cast %c7_i32 : i32 to index
    %43 = memref.load %arg1[%42] : memref<8xi32, #tpu.memory_space<smem>>
    %44 = arith.index_cast %43 : i32 to index
    %c0_13 = arith.constant 0 : index
    %45 = vector.load %arg2[%44, %c0_13] : memref<64x128xf32, #tpu.memory_space<vmem>>, vector<1x128xf32>
    %46 = arith.index_cast %c7_i32 : i32 to index
    %c0_14 = arith.constant 0 : index
    %47 = vector.load %arg3[%46, %c0_14] : memref<8x128xf32, #tpu.memory_space<vmem>>, vector<1x128xf32>
    tpu.vector_store %arg3[%46, %c0_14], %45 {strides = array<i32>} : memref<8x128xf32, #tpu.memory_space<vmem>>, vector<1x128xf32>,
    %c8_i32 = arith.constant 8 : i32
    return
  }
  func.func @transform_0(%arg0: i32, %arg1: memref<8xi32, #tpu.memory_space<smem>>) -> (i32, i32) {
    %c0_i32 = arith.constant 0 : i32
    %c0_i32_0 = arith.constant 0 : i32
    %c0_i32_1 = arith.constant 0 : i32
    return %c0_i32, %c0_i32_0 : i32, i32
  }
  func.func @transform_1(%arg0: i32, %arg1: memref<8xi32, #tpu.memory_space<smem>>) -> (i32, i32) {
    %c0_i32 = arith.constant 0 : i32
    %c0_i32_0 = arith.constant 0 : i32
    %c0_i32_1 = arith.constant 0 : i32
    return %c0_i32, %c0_i32_0 : i32, i32
  }
}

</mosaic_0001>

<llo_original>
// kernel: tpu_custom_call.1
$region0: #{tpu_custom_call.1}
  #allocation0 [shape = 'u32[]', space=smem, size = 0x4, offset = 0x4, fixed_abs, tag = 'smem constant byte address 0x4 - core index']
  #allocation1 [shape = 'u32[144,128]{1,0:T(1,128)}', space=vmem, size = 0x12000, scoped, tag = 'internal scratch']
  #allocation2 [shape = 's32[1]{0}', space=sflag, size = 0x4, scoped, tag = 'scoped memory for tpu_custom_call.1']
  #allocation3 [shape = 'u8[512]{0}', space=smem, size = 0x200, scoped, tag = 'prefetched SMEM operand 0']
  %s0 = inlined_call_operand.hbm [shape: s32[8], index: 0, kind: input, shape index: {}]
  %s1 = inlined_call_operand.hbm [shape: f32[64,128], index: 1, kind: input, shape index: {}]
  %s2 = inlined_call_operand.hbm [shape: f32[8,128], index: 2, kind: output, shape index: {}]
  %s3 = sld [smem:[#allocation0]]
  $region18: #{tpu_custom_call.1} parent=0
    _
  %s5 = ssub.s32 1, %s3
  %s6 = scalar_select 0, %s5, %s3
  %8 = dma.hbm_to_smem %s0, 16, [#allocation3], [#allocation2]
  %9 = dma.done [#allocation2], 16
  %10 = sfence
  $region1: #{tpu_custom_call.1} parent=0
    #allocation4 [shape = 'u8[32768]{0}', space=vmem, size = 0x8000, scoped, tag = 'input window, operand 1, single buffered']
    #allocation5 [shape = 's32[1]{0}', space=sflag, size = 0x4, scoped, tag = 'scoped memory for tpu_custom_call.1']
    #allocation6 [shape = 's32[1]{0}', space=sflag, size = 0x4, scoped, tag = 'scoped memory for tpu_custom_call.1']
    #allocation7 [shape = 'u8[4096]{0}', space=vmem, size = 0x1000, scoped, tag = 'output window, operand 0, single buffered']
    %11 = vsyncpa [#allocation5], 0
    %12 = vsyncpa [#allocation6], 0
    // Predicated region
    $region2: #{tpu_custom_call.1} parent=1 // pred_check
      _
    $region3: #{tpu_custom_call.1} parent=1 // pred_check_branch
      %14 = sbr.rel (0) target = $region5
    $region4: #{tpu_custom_call.1} parent=1 // pred_region
      %s16 = ssub.s32 1024, 1024
      %17 = vsyncadd [#allocation5], %s16
      %s18 = sshll.u32 [#allocation4], 4
      %s19 = int_to_ptr.vmem [resolvable:$true] %s18
      %24 = dma.hbm_to_vmem [thread:$0]  %s1, 1024, %s19, [#allocation5], 128, 128, 8
    $region5: #{tpu_custom_call.1} parent=1 // pred_fallthru
      _
    // Predicated region
    $region6: #{tpu_custom_call.1} parent=1 // pred_check
      _
    $region7: #{tpu_custom_call.1} parent=1 // pred_check_branch
      %26 = sbr.rel (0) target = $region9
    $region8: #{tpu_custom_call.1} parent=1 // pred_region
      %27 = dma.done [#allocation5], 1024
    $region9: #{tpu_custom_call.1} parent=1 // pred_fallthru
      _
    %s28 = sld [smem:[#allocation3]]
    %s29 = scalar_lea.vmem [#allocation4], %s28
    %v30 = vld [vmem:[%s29] sm:$0x1]
    %31 = vst [vmem:[#allocation7] sm:$0x1] %v30
    %s32 = sld [smem:[#allocation3 + $0x1]]
    %s33 = scalar_lea.vmem [#allocation4], %s32
    %v34 = vld [vmem:[%s33] sm:$0x1]
    %35 = vst [vmem:[#allocation7 + $0x1] sm:$0x1] %v34
    %s36 = sld [smem:[#allocation3 + $0x2]]
    %s37 = scalar_lea.vmem [#allocation4], %s36
    %v38 = vld [vmem:[%s37] sm:$0x1]
    %39 = vst [vmem:[#allocation7 + $0x2] sm:$0x1] %v38
    %s40 = sld [smem:[#allocation3 + $0x3]]
    %s41 = scalar_lea.vmem [#allocation4], %s40
    %v42 = vld [vmem:[%s41] sm:$0x1]
    %43 = vst [vmem:[#allocation7 + $0x3] sm:$0x1] %v42
    %s44 = sld [smem:[#allocation3 + $0x4]]
    %s45 = scalar_lea.vmem [#allocation4], %s44
    %v46 = vld [vmem:[%s45] sm:$0x1]
    %47 = vst [vmem:[#allocation7 + $0x4] sm:$0x1] %v46
    %s48 = sld [smem:[#allocation3 + $0x5]]
    %s49 = scalar_lea.vmem [#allocation4], %s48
    %v50 = vld [vmem:[%s49] sm:$0x1]
    %51 = vst [vmem:[#allocation7 + $0x5] sm:$0x1] %v50
    %s52 = sld [smem:[#allocation3 + $0x6]]
    %s53 = scalar_lea.vmem [#allocation4], %s52
    %v54 = vld [vmem:[%s53] sm:$0x1]
    %55 = vst [vmem:[#allocation7 + $0x6] sm:$0x1] %v54
    %s56 = sld [smem:[#allocation3 + $0x7]]
    %s57 = scalar_lea.vmem [#allocation4], %s56
    %v58 = vld [vmem:[%s57] sm:$0x1]
    %59 = vst [vmem:[#allocation7 + $0x7] sm:$0x1] %v58
    // Predicated region
    $region10: #{tpu_custom_call.1} parent=1 // pred_check
      _
    $region11: #{tpu_custom_call.1} parent=1 // pred_check_branch
      %61 = sbr.rel (0) target = $region13
    $region12: #{tpu_custom_call.1} parent=1 // pred_region
      %s63 = ssub.s32 128, 128
      %64 = vsyncadd [#allocation6], %s63
      %s66 = sshll.u32 [#allocation7], 4
      %s67 = int_to_ptr.vmem [resolvable:$true] %s66
      %69 = dma.vmem_to_hbm [thread:$0]  %s67, 128, %s2, [#allocation6]
    $region13: #{tpu_custom_call.1} parent=1 // pred_fallthru
      _
    // Predicated region
    $region14: #{tpu_custom_call.1} parent=1 // pred_check
      _
    $region15: #{tpu_custom_call.1} parent=1 // pred_check_branch
      %71 = sbr.rel (0) target = $region17
    $region16: #{tpu_custom_call.1} parent=1 // pred_region
      %72 = dma.done [#allocation6], 128
    $region17: #{tpu_custom_call.1} parent=1 // pred_fallthru
      _
    %73 = vsyncpa [#allocation5], 1
    %74 = vsyncpa [#allocation6], 1

</llo_original>
